<compile_context>
chip_gen: v7x
topology: tpu7x:2x2x1
jax: 0.10.0
libtpu: 0.0.40
codegen_flags: <defaults>
</compile_context>

<pallas_src>
import functools

import jax
import jax.numpy as jnp
from jax.experimental import pallas as pl
from jax.experimental.pallas import tpu as pltpu


def _int8_linear_kernel(x_ref, wq_ref, scb_ref, bias_ref, o_ref, xq_ref, scale_ref):
    """One (tm, tn) output tile.

    x_ref:     (tm, K)  activation tile (input dtype); block index constant in j
    wq_ref:    (K, tn)  int8 quantized weight tile (pre-transposed)
    scb_ref:   (1, tn)  f32 weight row-absmax, pre-divided by 127*127
    bias_ref:  (1, tn)  f32
    o_ref:     (tm, tn) output tile (x dtype)
    xq_ref:    (tm, K)  bf16 scratch: quantized activation (integers in [-127, 127])
    scale_ref: (tm, 1)  f32 scratch: per-row activation absmax
    """
    j = pl.program_id(1)

    # Per-token quantization hoisted out of the N loop: the x tile is resident across j,
    # so compute absmax / round once per row block and reuse for every output-column tile.
    @pl.when(j == 0)
    def _():
        x = x_ref[...].astype(jnp.float32)                      # (tm, K)
        absmax = jnp.max(jnp.abs(x), axis=-1, keepdims=True)    # (tm, 1)
        safe = jnp.where(absmax > 0.0, absmax, 1.0)
        # integers in [-127, 127] are exactly representable in bf16
        xq_ref[...] = jnp.round(x * (127.0 / safe)).astype(jnp.bfloat16)
        scale_ref[...] = absmax

    # int8-valued matmul on the MXU: bf16 operands (exact for +/-127), f32 accumulation.
    wq = wq_ref[...].astype(jnp.bfloat16)                       # (K, tn), exact upcast
    acc = jnp.dot(xq_ref[...], wq, preferred_element_type=jnp.float32)  # (tm, tn) f32

    # Dequantize: row scale of x * per-feature weight scale (1/127^2 already folded), + bias.
    out = acc * (scale_ref[...] * scb_ref[...]) + bias_ref[...]
    o_ref[...] = out.astype(o_ref.dtype)


@functools.partial(jax.jit, static_argnames=("tm", "tn"))
def linear8bitlt_forward(x, wq_t, scb, bias, *, tm=256, tn=512):
    """x: [..., K] float; wq_t: [K, N] int8; scb: [N] f32; bias: [N] f32 or None.
    Returns [..., N] in x.dtype."""
    orig_shape = x.shape
    K = orig_shape[-1]
    N = wq_t.shape[-1]
    x2 = x.reshape(-1, K)
    M = x2.shape[0]

    # Clamp tiles to the problem (block dims must be divisible by (8,128) or equal full dims).
    tm = min(tm, M)
    tn = min(tn, N)

    # Fold the 1/(127*127) dequant constant into SCB once, on the host.
    scb2 = (scb.astype(jnp.float32) * (1.0 / (127.0 * 127.0))).reshape(1, N)
    if bias is None:
        bias2 = jnp.zeros((1, N), jnp.float32)
    else:
        bias2 = bias.reshape(1, N).astype(jnp.float32)

    grid = (pl.cdiv(M, tm), pl.cdiv(N, tn))

    # Explicit VMEM budget: double-buffered x / int8-weight / output tiles, the in-kernel
    # bf16 weight upcast, the f32 quantization temp, and the two scratch buffers.
    x_b = x2.dtype.itemsize
    o_b = x2.dtype.itemsize
    vmem_bytes = (
        2 * tm * K * x_b          # x tile, double-buffered
        + 2 * K * tn * 1          # int8 weight tile, double-buffered
        + 2 * tm * tn * o_b       # output tile, double-buffered
        + 4 * 8 * tn * 4          # SCB + bias (sublane-padded), double-buffered
        + tm * K * 2              # xq bf16 scratch
        + tm * 128 * 4            # absmax scratch (lane-padded)
        + K * tn * 2              # in-kernel bf16 weight copy
        + tm * K * 4              # f32 activation temp during quantization
        + tm * tn * 4             # f32 accumulator temp
    )
    vmem_limit = min(max(int(vmem_bytes * 1.25) + (2 << 20), 16 << 20), 100 << 20)

    out = pl.pallas_call(
        _int8_linear_kernel,
        out_shape=jax.ShapeDtypeStruct((M, N), x.dtype),
        grid_spec=pltpu.PrefetchScalarGridSpec(
            num_scalar_prefetch=0,
            grid=grid,
            in_specs=[
                pl.BlockSpec((tm, K), lambda i, j: (i, 0)),   # activation tile (full K)
                pl.BlockSpec((K, tn), lambda i, j: (0, j)),   # int8 weight tile (pre-transposed)
                pl.BlockSpec((1, tn), lambda i, j: (0, j)),   # SCB / 127^2
                pl.BlockSpec((1, tn), lambda i, j: (0, j)),   # bias
            ],
            out_specs=pl.BlockSpec((tm, tn), lambda i, j: (i, j)),
            scratch_shapes=[
                pltpu.VMEM((tm, K), jnp.bfloat16),            # quantized activation, reused over j
                pltpu.VMEM((tm, 1), jnp.float32),             # per-row activation absmax
            ],
        ),
        compiler_params=pltpu.CompilerParams(
            # j must stay sequential ("arbitrary"): the quantization scratch written at
            # j == 0 is reused by every j for the same i block.  i is "parallel" for megacore.
            dimension_semantics=("parallel", "arbitrary"),
            vmem_limit_bytes=vmem_limit,
        ),
    )(x2, wq_t, scb2, bias2)

    return out.reshape(*orig_shape[:-1], N)


def quantize_weight_int8(weight):
    """Int8Params-style per-output-row quantization. weight: [N, K] float.
    Returns CB [N, K] int8 and SCB [N] f32 (row absmax)."""
    w = weight.astype(jnp.float32)
    scb = jnp.max(jnp.abs(w), axis=-1)                        # [N]
    safe = jnp.where(scb > 0.0, scb, 1.0)
    cb = jnp.round(w * (127.0 / safe[:, None])).astype(jnp.int8)
    return cb, scb


def reference_forward(x, cb, scb, bias):
    """Pure-JAX reference of the same int8 semantics (sanity check)."""
    xf = x.astype(jnp.float32)
    absmax = jnp.max(jnp.abs(xf), axis=-1, keepdims=True)
    safe = jnp.where(absmax > 0.0, absmax, 1.0)
    xq = jnp.round(xf * (127.0 / safe))
    acc = xq @ cb.astype(jnp.float32).T
    out = acc * (absmax * scb.reshape(*([1] * (x.ndim - 1)), -1)) / (127.0 * 127.0)
    return (out + bias.astype(jnp.float32)).astype(x.dtype)


if __name__ == "__main__":
    key = jax.random.PRNGKey(0)
    k_x, k_w, k_b = jax.random.split(key, 3)

    batch, seq, hidden, out_features = 2, 8, 32, 64

    # Deterministic synthetic parameters (module __init__ takes fp weight [out, in], bias [out]).
    weight = jax.random.normal(k_w, (out_features, hidden), dtype=jnp.float32) * 0.05
    bias = jax.random.normal(k_b, (out_features,), dtype=jnp.float32) * 0.1
    x = jax.random.normal(k_x, (batch, seq, hidden), dtype=jnp.float32)

    # Int8Params setup (CB / SCB), done once as glue.
    cb, scb = quantize_weight_int8(weight)
    wq_t = cb.T                                                # [K, N], kernel-friendly layout

    out = linear8bitlt_forward(x, wq_t, scb, bias)
    out = jax.block_until_ready(out)

    ref = reference_forward(x, cb, scb, bias)
    assert out.shape == (batch, seq, out_features)
    assert jnp.allclose(out, ref, atol=1e-4, rtol=1e-4), "mismatch vs reference int8 semantics"

    print("KERNEL_OK")
</pallas_src>

<mosaic_0001>
module attributes {stable_mosaic.version = 11 : i64} {
  func.func @_int8_linear_kernel(%arg0: i32, %arg1: i32, %arg2: memref<16x32xf32, #tpu.memory_space<vmem>>, %arg3: memref<32x64xi8, #tpu.memory_space<vmem>>, %arg4: memref<1x64xf32, #tpu.memory_space<vmem>>, %arg5: memref<1x64xf32, #tpu.memory_space<vmem>>, %arg6: memref<16x64xf32, #tpu.memory_space<vmem>>, %arg7: memref<16x32xbf16, #tpu.memory_space<vmem>>, %arg8: memref<16x1xf32, #tpu.memory_space<vmem>>) attributes {dimension_semantics = [#tpu.dimension_semantics<parallel>, #tpu.dimension_semantics<arbitrary>], iteration_bounds = array<i64: 1, 1>, scalar_prefetch = 0 : i64, scratch_operands = 2 : i64, tpu.core_type = #tpu.core_type<tc>, window_params = [{transform_indices = @transform_0, window_bounds = array<i64: 16, 32>}, {transform_indices = @transform_1, window_bounds = array<i64: 32, 64>}, {transform_indices = @transform_2, window_bounds = array<i64: 1, 64>}, {transform_indices = @transform_3, window_bounds = array<i64: 1, 64>}, {transform_indices = @transform_4, window_bounds = array<i64: 16, 64>}]} {
    %c0_i32 = arith.constant 0 : i32
    %0 = arith.cmpi eq, %arg1, %c0_i32 : i32
    %1 = arith.extui %0 : i1 to i32
    %c0_i32_0 = arith.constant 0 : i32
    %2 = arith.cmpi ne, %1, %c0_i32_0 : i32
    scf.if %2 {
      %c0_12 = arith.constant 0 : index
      %c0_13 = arith.constant 0 : index
      %17 = vector.load %arg2[%c0_12, %c0_13] : memref<16x32xf32, #tpu.memory_space<vmem>>, vector<16x32xf32>
      %18 = math.absf %17 : vector<16x32xf32>
      %cst_14 = arith.constant dense<0xFF800000> : vector<16xf32>
      %19 = vector.multi_reduction <maximumf>, %18, %cst_14 [1] : vector<16x32xf32> to vector<16xf32>
      %20 = vector.shape_cast %19 : vector<16xf32> to vector<16x1xf32>
      %cst_15 = arith.constant 0.000000e+00 : f32
      %21 = vector.broadcast %cst_15 : f32 to vector<16x1xf32>
      %22 = arith.cmpf ogt, %20, %21 : vector<16x1xf32>
      %cst_16 = arith.constant 1.000000e+00 : f32
      %23 = vector.broadcast %cst_16 : f32 to vector<16x1xf32>
      %24 = arith.select %22, %20, %23 : vector<16x1xi1>, vector<16x1xf32>
      %cst_17 = arith.constant 1.270000e+02 : f32
      %25 = vector.broadcast %cst_17 : f32 to vector<16x1xf32>
      %26 = arith.divf %25, %24 : vector<16x1xf32>
      %27 = vector.broadcast %26 : vector<16x1xf32> to vector<16x32xf32>
      %28 = arith.mulf %17, %27 : vector<16x32xf32>
      %29 = math.roundeven %28 : vector<16x32xf32>
      %30 = arith.truncf %29 : vector<16x32xf32> to vector<16x32xbf16>
      %c0_18 = arith.constant 0 : index
      %c0_19 = arith.constant 0 : index
      %31 = vector.load %arg7[%c0_18, %c0_19] : memref<16x32xbf16, #tpu.memory_space<vmem>>, vector<16x32xbf16>
      tpu.vector_store %arg7[%c0_18, %c0_19], %30 {strides = array<i32>} : memref<16x32xbf16, #tpu.memory_space<vmem>>, vector<16x32xbf16>,
      %c0_20 = arith.constant 0 : index
      %c0_21 = arith.constant 0 : index
      %32 = vector.load %arg8[%c0_20, %c0_21] : memref<16x1xf32, #tpu.memory_space<vmem>>, vector<16x1xf32>
      tpu.vector_store %arg8[%c0_20, %c0_21], %20 {strides = array<i32>} : memref<16x1xf32, #tpu.memory_space<vmem>>, vector<16x1xf32>,
    } else {
    }
    %c0 = arith.constant 0 : index
    %c0_1 = arith.constant 0 : index
    %3 = vector.load %arg3[%c0, %c0_1] : memref<32x64xi8, #tpu.memory_space<vmem>>, vector<32x64xi8>
    %4 = arith.sitofp %3 : vector<32x64xi8> to vector<32x64xbf16>
    %c0_2 = arith.constant 0 : index
    %c0_3 = arith.constant 0 : index
    %5 = vector.load %arg7[%c0_2, %c0_3] : memref<16x32xbf16, #tpu.memory_space<vmem>>, vector<16x32xbf16>
    %cst = arith.constant dense<0.000000e+00> : vector<16x64xf32>
    %6 = tpu.matmul %5, %4, %cst {dimension_numbers = #tpu.dot_dimension_numbers<[1], [0], [0], [1], [0, 0, 1, 1], [], []>} : vector<16x32xbf16>, vector<32x64xbf16>, vector<16x64xf32> -> vector<16x64xf32>
    %c0_4 = arith.constant 0 : index
    %c0_5 = arith.constant 0 : index
    %7 = vector.load %arg8[%c0_4, %c0_5] : memref<16x1xf32, #tpu.memory_space<vmem>>, vector<16x1xf32>
    %c0_6 = arith.constant 0 : index
    %c0_7 = arith.constant 0 : index
    %8 = vector.load %arg4[%c0_6, %c0_7] : memref<1x64xf32, #tpu.memory_space<vmem>>, vector<1x64xf32>
    %9 = vector.broadcast %7 : vector<16x1xf32> to vector<16x64xf32>
    %10 = vector.broadcast %8 : vector<1x64xf32> to vector<16x64xf32>
    %11 = arith.mulf %9, %10 : vector<16x64xf32>
    %12 = arith.mulf %6, %11 : vector<16x64xf32>
    %c0_8 = arith.constant 0 : index
    %c0_9 = arith.constant 0 : index
    %13 = vector.load %arg5[%c0_8, %c0_9] : memref<1x64xf32, #tpu.memory_space<vmem>>, vector<1x64xf32>
    %14 = vector.broadcast %13 : vector<1x64xf32> to vector<16x64xf32>
    %15 = arith.addf %12, %14 : vector<16x64xf32>
    %c0_10 = arith.constant 0 : index
    %c0_11 = arith.constant 0 : index
    %16 = vector.load %arg6[%c0_10, %c0_11] : memref<16x64xf32, #tpu.memory_space<vmem>>, vector<16x64xf32>
    tpu.vector_store %arg6[%c0_10, %c0_11], %15 {strides = array<i32>} : memref<16x64xf32, #tpu.memory_space<vmem>>, vector<16x64xf32>,
    return
  }
  func.func @transform_0(%arg0: i32, %arg1: i32) -> (i32, i32) {
    %c0_i32 = arith.constant 0 : i32
    %c0_i32_0 = arith.constant 0 : i32
    return %arg0, %c0_i32 : i32, i32
  }
  func.func @transform_1(%arg0: i32, %arg1: i32) -> (i32, i32) {
    %c0_i32 = arith.constant 0 : i32
    %c0_i32_0 = arith.constant 0 : i32
    return %c0_i32, %arg1 : i32, i32
  }
  func.func @transform_2(%arg0: i32, %arg1: i32) -> (i32, i32) {
    %c0_i32 = arith.constant 0 : i32
    %c0_i32_0 = arith.constant 0 : i32
    return %c0_i32, %arg1 : i32, i32
  }
  func.func @transform_3(%arg0: i32, %arg1: i32) -> (i32, i32) {
    %c0_i32 = arith.constant 0 : i32
    %c0_i32_0 = arith.constant 0 : i32
    return %c0_i32, %arg1 : i32, i32
  }
  func.func @transform_4(%arg0: i32, %arg1: i32) -> (i32, i32) {
    %c0_i32 = arith.constant 0 : i32
    return %arg0, %arg1 : i32, i32
  }
}

</mosaic_0001>

<llo_original>
// kernel: linear8bitlt_forward.1
$region0: #{linear8bitlt_forward.1}
  #allocation0 [shape = 'u32[]', space=smem, size = 0x4, offset = 0x4, fixed_abs, tag = 'smem constant byte address 0x4 - core index']
  #allocation1 [shape = 'u32[144,128]{1,0:T(1,128)}', space=vmem, size = 0x12000, scoped, tag = 'internal scratch']
  #allocation2 [shape = 'bf16[16,32]{1,0:T(16,128)(2,1)}', space=vmem, size = 0x1000, scoped, tag = 'scratch operand']
  #allocation3 [shape = 'f32[16,1]{1,0:T(8,128)}', space=vmem, size = 0x2000, scoped, tag = 'scratch operand']
  %s0 = inlined_call_operand.hbm [shape: f32[16,32], index: 0, kind: input, shape index: {}]
  %s1 = inlined_call_operand.vmem [shape: s8[32,64], index: 1, kind: input, shape index: {}]
  %s2 = inlined_call_operand.vmem [shape: f32[1,64], index: 2, kind: input, shape index: {}]
  %s3 = inlined_call_operand.vmem [shape: f32[1,64], index: 3, kind: input, shape index: {}]
  %s4 = inlined_call_operand.hbm [shape: f32[16,64], index: 4, kind: output, shape index: {}]
  %s5 = sld [smem:[#allocation0]]
  $region34: #{linear8bitlt_forward.1} parent=0
    _
  %s7 = ssub.s32 1, %s5
  %s8 = scalar_select 0, %s7, %s5
  $region1: #{linear8bitlt_forward.1} parent=0
    #allocation4 [shape = 'u8[8192]{0}', space=vmem, size = 0x2000, scoped, tag = 'input window, operand 0, single buffered']
    #allocation5 [shape = 's32[1]{0}', space=sflag, size = 0x4, scoped, tag = 'scoped memory for linear8bitlt_forward.1']
    #allocation6 [shape = 's32[1]{0}', space=sflag, size = 0x4, scoped, tag = 'scoped memory for linear8bitlt_forward.1']
    #allocation7 [shape = 'u8[8192]{0}', space=vmem, size = 0x2000, scoped, tag = 'output window, operand 0, single buffered']
    %9 = vsyncpa [#allocation5], 0
    %10 = vsyncpa [#allocation6], 0
    // Predicated region
    $region2: #{linear8bitlt_forward.1} parent=1 // pred_check
      _
    $region3: #{linear8bitlt_forward.1} parent=1 // pred_check_branch
      %12 = sbr.rel (0) target = $region5
    $region4: #{linear8bitlt_forward.1} parent=1 // pred_region
      %s14 = ssub.s32 256, 256
      %15 = vsyncadd [#allocation5], %s14
      %s16 = sshll.u32 [#allocation4], 4
      %s17 = int_to_ptr.vmem [resolvable:$true] %s16
      %22 = dma.hbm_to_vmem [thread:$0]  %s0, 256, %s17, [#allocation5], 128, 128, 8
    $region5: #{linear8bitlt_forward.1} parent=1 // pred_fallthru
      _
    // Predicated region
    $region6: #{linear8bitlt_forward.1} parent=1 // pred_check
      _
    $region7: #{linear8bitlt_forward.1} parent=1 // pred_check_branch
      %24 = sbr.rel (0) target = $region9
    $region8: #{linear8bitlt_forward.1} parent=1 // pred_region
      _
    $region9: #{linear8bitlt_forward.1} parent=1 // pred_fallthru
      _
    // Predicated region
    $region10: #{linear8bitlt_forward.1} parent=1 // pred_check
      _
    $region11: #{linear8bitlt_forward.1} parent=1 // pred_check_branch
      %26 = sbr.rel (0) target = $region13
    $region12: #{linear8bitlt_forward.1} parent=1 // pred_region
      _
    $region13: #{linear8bitlt_forward.1} parent=1 // pred_fallthru
      _
    // Predicated region
    $region14: #{linear8bitlt_forward.1} parent=1 // pred_check
      _
    $region15: #{linear8bitlt_forward.1} parent=1 // pred_check_branch
      %28 = sbr.rel (0) target = $region17
    $region16: #{linear8bitlt_forward.1} parent=1 // pred_region
      _
    $region17: #{linear8bitlt_forward.1} parent=1 // pred_fallthru
      _
    // Predicated region
    $region18: #{linear8bitlt_forward.1} parent=1 // pred_check
      _
    $region19: #{linear8bitlt_forward.1} parent=1 // pred_check_branch
      %30 = sbr.rel (0) target = $region21
    $region20: #{linear8bitlt_forward.1} parent=1 // pred_region
      %31 = dma.done [#allocation5], 256
    $region21: #{linear8bitlt_forward.1} parent=1 // pred_fallthru
      _
    %p33 = scmp.eq.s32.totalorder 0, 0
    // Predicated region
    $region22: #{linear8bitlt_forward.1} parent=1 // pred_check
      %p34 = pneg %p33
    $region23: #{linear8bitlt_forward.1} parent=1 // pred_check_branch
      %36 = sbr.rel (%p34) target = $region25
    $region24: #{linear8bitlt_forward.1} parent=1 // pred_region
      %v37 = vld [vmem:[#allocation4] sm:$0xff]
      %v38 = vld [vmem:[#allocation4 + $0x8] sm:$0xff]
      %v39 = vand.u32 2147483647, %v37
      %v40 = vand.u32 2147483647, %v38
      %vm41 = vcmask 261120
      %v42 = vsel %vm41, %v39, -inf
      %43 = vmax.xlane.f32.xlu0 %v42
      %v44 = vpop.xlane.xlu0 %43
      %v45 = vsel %vm41, %v40, -inf
      %46 = vmax.xlane.f32.xlu0 %v45
      %v47 = vpop.xlane.xlu0 %46
      %vm48 = vcmp.gt.f32.partialorder %v44, 0.0
      %vm49 = vcmp.gt.f32.partialorder %v47, 0.0
      %v50 = vsel %vm48, %v44, 1.0
      %v51 = vsel %vm49, %v47, 1.0
      %v52 = vrcp.pop %v50
      %v53 = vmul.f32 127.0, %v52
      %v54 = vrcp.pop %v51
      %v55 = vmul.f32 127.0, %v54
      %v56 = vmul.f32 %v37, %v53
      %v57 = vmul.f32 %v38, %v55
      %v58 = vround.ne.pseudo %v56
      %v59 = vround.ne.pseudo %v57
      %v60 = vpack.c.bf16 %v59, %v58
      %61 = vst.msk [vmem:[#allocation2] sm:$0xff] %vm41, %v60
      %vm62 = vcmask 7168
      %63 = vst.msk [vmem:[#allocation3] sm:$0xff] %vm62, %v44
      %64 = vst.msk [vmem:[#allocation3 + $0x8] sm:$0xff] %vm62, %v47
    $region25: #{linear8bitlt_forward.1} parent=1 // pred_fallthru
      _
    %v65 = vld [vmem:[%s1] sm:$0xff]
    %v66 = vunpack.c.l.s8.bf16 %v65
    %v67 = vunpack.c.h.s8.bf16 %v65
    %v68 = vld [vmem:[#allocation2] sm:$0xff]
    %vm69 = vcmask 261120
    %v71 = vsel %vm69, %v68, 0
    %73 = vmatprep.subr.bf16.mxu0 0
    %74 = vmatpush1.bf16.msra.mxu0 %v66
    %75 = vmatprep.subr.bf16.mxu0 0
    %76 = vmatpush1.bf16.msra.mxu0 %v67
    %77 = vmatprep.subr.bf16.mxu0 0
    %78 = vmatpush1.bf16.msra.mxu0 0
    %79 = vmatprep.subr.bf16.mxu0 0
    %80 = vmatpush1.bf16.msra.mxu0 0
    %81 = vmatprep.subr.bf16.mxu0 0
    %82 = vmatpush1.bf16.msra.mxu0 0
    %83 = vmatprep.subr.bf16.mxu0 0
    %84 = vmatpush1.bf16.msra.mxu0 0
    %85 = vmatprep.subr.bf16.mxu0 0
    %86 = vmatpush1.bf16.msra.mxu0 0
    %87 = vmatprep.subr.bf16.mxu0 0
    %88 = vmatpush1.bf16.msra.mxu0 0
    %89 = vmatprep.subr.bf16.mxu0 0
    %90 = vmatpush1.bf16.msra.mxu0 0
    %91 = vmatprep.subr.bf16.mxu0 0
    %92 = vmatpush1.bf16.msra.mxu0 0
    %93 = vmatprep.subr.bf16.mxu0 0
    %94 = vmatpush1.bf16.msra.mxu0 0
    %95 = vmatprep.subr.bf16.mxu0 0
    %96 = vmatpush1.bf16.msra.mxu0 0
    %97 = vmatprep.subr.bf16.mxu0 0
    %98 = vmatpush1.bf16.msra.mxu0 0
    %99 = vmatprep.subr.bf16.mxu0 0
    %100 = vmatpush1.bf16.msra.mxu0 0
    %101 = vmatprep.subr.bf16.mxu0 0
    %102 = vmatpush1.bf16.msra.mxu0 0
    %103 = vmatprep.subr.bf16.mxu0 0
    %104 = vmatpush1.bf16.msra.mxu0 0
    %105 = vmatprep.mubr.bf16.mxu0 0
    %106 = vmatmul.mubr.bf16.gmra.mrb[0].mxu0 %v71
    %v107 = vpop.f32.mrb[0].mxu0
    %v108 = vadd.f32 0.0, %v107
    %v109 = vpop.f32.mrb[0].mxu0
    %v110 = vpop.f32.mrb[0].mxu0
    %v111 = vadd.f32 0.0, %v110
    %v112 = vpop.f32.mrb[0].mxu0
    %113 = vdwg.mxu0
    %v114 = vld [vmem:[#allocation3] sm:$0xff]
    %v115 = vld [vmem:[#allocation3 + $0x8] sm:$0xff]
    %v116 = vld [vmem:[%s2] sm:$0x1]
    %118 = vset.pattern.permute.xlu0 0
    %119 = vperm.xlu0 %118, %v114
    %v120 = vpop.permute.xlu0 %119
    %123 = vset.pattern.permute.xlu0 0
    %124 = vperm.xlu0 %123, %v115
    %v125 = vpop.permute.xlu0 %124
    %v128 = vlaneseq
    %v129 = vshrl.u32 %v128, 7
    %v130 = vsub.s32 0, %v129
    %v131 = vrot.slane %v116, %v130
    %v133 = vmul.f32 %v120, %v131
    %v134 = vmul.f32 %v125, %v131
    %v135 = vmul.f32 %v108, %v133
    %v136 = vmul.f32 %v111, %v134
    %v137 = vld [vmem:[%s3] sm:$0x1]
    %v139 = vlaneseq
    %v140 = vshrl.u32 %v139, 7
    %v141 = vsub.s32 0, %v140
    %v142 = vrot.slane %v137, %v141
    %v144 = vadd.f32 %v135, %v142
    %v145 = vadd.f32 %v136, %v142
    %vm146 = vcmask 523264
    %147 = vst.msk [vmem:[#allocation7] sm:$0xff] %vm146, %v144
    %148 = vst.msk [vmem:[#allocation7 + $0x8] sm:$0xff] %vm146, %v145
    // Predicated region
    $region26: #{linear8bitlt_forward.1} parent=1 // pred_check
      _
    $region27: #{linear8bitlt_forward.1} parent=1 // pred_check_branch
      %150 = sbr.rel (0) target = $region29
    $region28: #{linear8bitlt_forward.1} parent=1 // pred_region
      %s152 = ssub.s32 256, 256
      %153 = vsyncadd [#allocation6], %s152
      %s154 = sshll.u32 [#allocation7], 4
      %s155 = int_to_ptr.vmem [resolvable:$true] %s154
      %160 = dma.vmem_to_hbm [thread:$0]  %s155, 256, %s4, [#allocation6], 128, 128, 8
    $region29: #{linear8bitlt_forward.1} parent=1 // pred_fallthru
      _
    // Predicated region
    $region30: #{linear8bitlt_forward.1} parent=1 // pred_check
      _
    $region31: #{linear8bitlt_forward.1} parent=1 // pred_check_branch
      %162 = sbr.rel (0) target = $region33
    $region32: #{linear8bitlt_forward.1} parent=1 // pred_region
      %163 = dma.done [#allocation6], 256
    $region33: #{linear8bitlt_forward.1} parent=1 // pred_fallthru
      _
    %164 = vsyncpa [#allocation5], 1
    %165 = vsyncpa [#allocation6], 1

</llo_original>
